<compile_context>
chip_gen: v7x
topology: tpu7x:2x2x1
jax: 0.10.0
libtpu: 0.0.40
codegen_flags: <defaults>
</compile_context>

<pallas_src>
import math

import jax
import jax.numpy as jnp
from jax.experimental import pallas as pl
from jax.experimental.pallas import tpu as pltpu


_SQRT_2_OVER_PI = math.sqrt(2.0 / math.pi)


def _gelu_tanh(x):
    # 0.5*x*(1+tanh(sqrt(2/pi)*(x+0.044715*x^3))) — identical to the PyTorch
    # module's custom gelu (tanh approximation).  tanh lowers to the EUP slot.
    inner = _SQRT_2_OVER_PI * x * (1.0 + 0.044715 * (x * x))
    return 0.5 * x * (1.0 + jnp.tanh(inner))


def _round_up(x, m):
    return ((x + m - 1) // m) * m


def _cdiv(a, b):
    return -(-a // b)


# ---------------------------------------------------------------------------
# Kernels
# ---------------------------------------------------------------------------
def _ffn_kernel_resident(x_ref, w1_ref, w2_ref, o_ref):
    # grid = (M_pad // tm,).  Weights are full blocks (index maps ignore i),
    # so they stay VMEM-resident across all row tiles; no accumulator needed.
    #   x_ref:  (tm, D)          w1_ref: (D, H_pad)
    #   w2_ref: (H_pad, O_pad)   o_ref:  (tm, O_pad)
    h = jnp.dot(x_ref[...], w1_ref[...], preferred_element_type=jnp.float32)
    h = _gelu_tanh(h)
    o_ref[...] = jnp.dot(h.astype(w2_ref.dtype), w2_ref[...],
                         preferred_element_type=jnp.float32).astype(o_ref.dtype)


def _ffn_kernel_streamed(x_ref, w1_ref, w2_ref, o_ref, acc_ref):
    # grid = (M_pad // tm, H_pad // th); H is the innermost ("arbitrary")
    # reduction axis, o_ref/acc_ref stay resident across it.
    #   x_ref:  (tm, D)       w1_ref: (D, th)     w2_ref: (th, O_pad)
    #   o_ref:  (tm, O_pad)   acc_ref:(tm, O_pad) f32 scratch
    h_idx = pl.program_id(1)

    @pl.when(h_idx == 0)
    def _():
        acc_ref[...] = jnp.zeros_like(acc_ref)

    h = jnp.dot(x_ref[...], w1_ref[...], preferred_element_type=jnp.float32)
    h = _gelu_tanh(h)
    acc_ref[...] += jnp.dot(h.astype(w2_ref.dtype), w2_ref[...],
                            preferred_element_type=jnp.float32)

    @pl.when(h_idx == pl.num_programs(1) - 1)
    def _():
        o_ref[...] = acc_ref[...].astype(o_ref.dtype)


# ---------------------------------------------------------------------------
# Weight prep (one-time, hoisted out of the per-step path)
# ---------------------------------------------------------------------------
def prepare_ffn_weights(w1, w2, *, compute_dtype=None):
    """Transpose + pad weights once.

    w1: (H, D)  PyTorch nn.Linear(input_d, H, bias=False).weight
    w2: (O, H)  PyTorch nn.Linear(H, output_d, bias=False).weight
    compute_dtype: optionally cast weights (e.g. jnp.bfloat16) — accuracy
      decision; halves weight HBM/VMEM traffic and roughly doubles MXU rate.
    Returns (w1t (D, H_pad), w2t (H_pad, O_pad), O) with H_pad/O_pad multiples
    of 128.  Zero-padded H columns/rows are inert (gelu(0)=0, contribute 0).
    """
    H, D = w1.shape
    O, H2 = w2.shape
    assert H == H2, "weight shapes disagree on the intermediate dim"
    if compute_dtype is not None:
        w1 = w1.astype(compute_dtype)
        w2 = w2.astype(compute_dtype)
    w1t = jnp.transpose(w1)            # (D, H)
    w2t = jnp.transpose(w2)            # (H, O)
    H_pad = _round_up(H, 128)
    O_pad = _round_up(O, 128)
    if H_pad != H:
        w1t = jnp.pad(w1t, ((0, 0), (0, H_pad - H)))
        w2t = jnp.pad(w2t, ((0, H_pad - H), (0, 0)))
    if O_pad != O:
        w2t = jnp.pad(w2t, ((0, 0), (0, O_pad - O)))
    return w1t, w2t, O


def _vmem_capacity_bytes():
    try:
        return int(pltpu.get_tpu_info().vmem_capacity_bytes)
    except Exception:
        return 64 << 20   # conservative (v7x per-TC) fallback


# ---------------------------------------------------------------------------
# Forward
# ---------------------------------------------------------------------------
def ffn_forward(hidden_states, w1t, w2t, out_d, *, tm=512, th=1024,
                out_dtype=None):
    """FFN forward with pre-transposed / pre-padded weights.

    hidden_states: (..., D);  w1t: (D, H_pad);  w2t: (H_pad, O_pad);
    out_d = true output dim (pad is sliced off).
    """
    D = hidden_states.shape[-1]
    D_w, H_pad = w1t.shape
    H_w, O_pad = w2t.shape
    assert D == D_w and H_pad == H_w
    assert H_pad % 128 == 0 and O_pad % 128 == 0

    lead_shape = hidden_states.shape[:-1]
    x = hidden_states.reshape(-1, D)
    M = x.shape[0]
    if out_dtype is None:
        out_dtype = hidden_states.dtype

    itx = jnp.dtype(x.dtype).itemsize
    itw = jnp.dtype(w1t.dtype).itemsize
    ito = jnp.dtype(out_dtype).itemsize

    vmem_cap = _vmem_capacity_bytes()
    budget = int(0.70 * vmem_cap)      # leave headroom for Mosaic internals

    # Row tile: large by default, clamped to the (sublane-rounded) row count.
    sublane = 16 if itx == 2 else 8
    tm_eff = min(_round_up(tm, sublane), _round_up(M, sublane))
    # v7x megacore: if one row tile would cover all rows but each half is
    # still MXU-filling (>=128 rows), split so both TensorCores get work.
    if _round_up(M, sublane) <= tm_eff and M >= 256:
        tm_eff = _round_up(_cdiv(M, 2), sublane)
    tm_min = min(tm_eff, max(sublane, 128))

    # VMEM demand models (double-buffered BlockSpec inputs/outputs counted 2x).
    def resident_bytes(tm_):
        return (2 * tm_ * D * itx            # x tile
                + 2 * D * H_pad * itw        # W1^T (full)
                + 2 * H_pad * O_pad * itw    # W2^T (full)
                + 2 * tm_ * O_pad * ito      # out tile
                + tm_ * H_pad * 4)           # f32 GELU intermediate

    def streamed_bytes(tm_, th_):
        return (2 * tm_ * D * itx
                + 2 * D * th_ * itw
                + 2 * th_ * O_pad * itw
                + 2 * tm_ * O_pad * ito
                + tm_ * O_pad * 4            # f32 accumulator scratch
                + tm_ * th_ * 4)             # f32 GELU intermediate

    # --- weights-resident fast path ---------------------------------------
    resident = resident_bytes(tm_min) <= budget
    if resident:
        while resident_bytes(tm_eff) > budget and tm_eff > tm_min:
            tm_eff = max(tm_min, _round_up(tm_eff // 2, sublane))
        th_eff = H_pad
        est = resident_bytes(tm_eff)
    else:
        # --- H-streamed fallback (weights too big for VMEM) ----------------
        # th must be a multiple of 128 that divides H_pad so no per-call
        # weight padding/copying is ever needed.
        th_divs = [d for d in range(128, H_pad + 1, 128) if H_pad % d == 0]
        th_target = max(128, _round_up(th, 128))

        def pick_th(tm_):
            best = None
            for d in th_divs:
                if d <= th_target and streamed_bytes(tm_, d) <= budget:
                    best = d
            return best

        th_eff = pick_th(tm_eff)
        while th_eff is None and tm_eff > tm_min:
            tm_eff = max(tm_min, _round_up(tm_eff // 2, sublane))
            th_eff = pick_th(tm_eff)
        if th_eff is None:
            th_eff = 128   # last resort; raise the limit and let Mosaic cope
        est = streamed_bytes(tm_eff, th_eff)

    M_pad = _round_up(M, tm_eff)
    if M_pad != M:
        x = jnp.pad(x, ((0, M_pad - M), (0, 0)))   # zero rows are inert

    vmem_limit = int(max(min(2 * est, int(0.9 * vmem_cap)), est, 32 << 20))

    if resident:
        grid = (M_pad // tm_eff,)
        out = pl.pallas_call(
            _ffn_kernel_resident,
            out_shape=jax.ShapeDtypeStruct((M_pad, O_pad), out_dtype),
            grid_spec=pltpu.PrefetchScalarGridSpec(
                num_scalar_prefetch=0,
                grid=grid,
                in_specs=[
                    pl.BlockSpec((tm_eff, D), lambda i: (i, 0)),
                    pl.BlockSpec((D, H_pad), lambda i: (0, 0)),      # resident
                    pl.BlockSpec((H_pad, O_pad), lambda i: (0, 0)),  # resident
                ],
                out_specs=pl.BlockSpec((tm_eff, O_pad), lambda i: (i, 0)),
            ),
            compiler_params=pltpu.CompilerParams(
                dimension_semantics=("parallel",),
                vmem_limit_bytes=vmem_limit,
            ),
        )(x, w1t, w2t)
    else:
        grid = (M_pad // tm_eff, H_pad // th_eff)
        out = pl.pallas_call(
            _ffn_kernel_streamed,
            out_shape=jax.ShapeDtypeStruct((M_pad, O_pad), out_dtype),
            grid_spec=pltpu.PrefetchScalarGridSpec(
                num_scalar_prefetch=0,
                grid=grid,
                in_specs=[
                    pl.BlockSpec((tm_eff, D), lambda i, h: (i, 0)),
                    pl.BlockSpec((D, th_eff), lambda i, h: (0, h)),
                    pl.BlockSpec((th_eff, O_pad), lambda i, h: (h, 0)),
                ],
                out_specs=pl.BlockSpec((tm_eff, O_pad), lambda i, h: (i, 0)),
                scratch_shapes=[pltpu.VMEM((tm_eff, O_pad), jnp.float32)],
            ),
            compiler_params=pltpu.CompilerParams(
                dimension_semantics=("parallel", "arbitrary"),
                vmem_limit_bytes=vmem_limit,
            ),
        )(x, w1t, w2t)

    out = out[:M, :out_d]
    return out.reshape(*lead_shape, out_d)


def ffn_layer(hidden_states, w1, w2, *, compute_dtype=None):
    """FFNLayer forward from PyTorch-layout weights.

    For repeated calls, call prepare_ffn_weights once and reuse ffn_forward
    so the transpose/pad (and optional dtype cast) is not paid per step.
    """
    w1t, w2t, out_d = prepare_ffn_weights(w1, w2, compute_dtype=compute_dtype)
    x = hidden_states
    if compute_dtype is not None:
        x = x.astype(compute_dtype)
    return ffn_forward(x, w1t, w2t, out_d, out_dtype=hidden_states.dtype)


def ffn_reference(hidden_states, w1, w2):
    # Pure-JAX reference matching the PyTorch module semantics.
    h = hidden_states @ w1.T
    h = _gelu_tanh(h)
    return h @ w2.T


if __name__ == "__main__":
    # Small shapes consistent with the module: batch=2, seq=8, input_d=32,
    # mult=4 -> hidden=128, output_d=32.
    # TODO(synk): dropout_rate is declared in FFNLayer.__init__ but never used
    # in its nn.Sequential, so there is nothing to translate for it.
    B, S, D = 2, 8, 32
    mult = 4
    H = int(D * mult)
    O = 32

    key = jax.random.PRNGKey(0)
    kx, k1, k2 = jax.random.split(key, 3)

    x = jax.random.normal(kx, (B, S, D), dtype=jnp.float32)
    # PyTorch Linear weight layout: (out_features, in_features).
    bound1 = 1.0 / math.sqrt(D)
    bound2 = 1.0 / math.sqrt(H)
    w1 = jax.random.uniform(k1, (H, D), dtype=jnp.float32,
                            minval=-bound1, maxval=bound1)
    w2 = jax.random.uniform(k2, (O, H), dtype=jnp.float32,
                            minval=-bound2, maxval=bound2)

    y = ffn_layer(x, w1, w2)
    y = jax.block_until_ready(y)

    y_ref = ffn_reference(x, w1, w2)
    assert y.shape == (B, S, O)
    assert jnp.allclose(y, y_ref, atol=1e-5, rtol=1e-5)

    print("KERNEL_OK")
</pallas_src>

<mosaic_0001>
module attributes {stable_mosaic.version = 11 : i64} {
  func.func @_ffn_kernel_resident(%arg0: i32, %arg1: memref<16x32xf32, #tpu.memory_space<vmem>>, %arg2: memref<32x128xf32, #tpu.memory_space<vmem>>, %arg3: memref<128x128xf32, #tpu.memory_space<vmem>>, %arg4: memref<16x128xf32, #tpu.memory_space<vmem>>) attributes {dimension_semantics = [#tpu.dimension_semantics<parallel>], iteration_bounds = array<i64: 1>, scalar_prefetch = 0 : i64, scratch_operands = 0 : i64, tpu.core_type = #tpu.core_type<tc>, window_params = [{transform_indices = @transform_0, window_bounds = array<i64: 16, 32>}, {pipeline_mode = #tpu.pipeline_mode<synchronous>, transform_indices = @transform_1, window_bounds = array<i64: 32, 128>}, {pipeline_mode = #tpu.pipeline_mode<synchronous>, transform_indices = @transform_2, window_bounds = array<i64: 128, 128>}, {transform_indices = @transform_3, window_bounds = array<i64: 16, 128>}]} {
    %c0 = arith.constant 0 : index
    %c0_0 = arith.constant 0 : index
    %0 = vector.load %arg1[%c0, %c0_0] : memref<16x32xf32, #tpu.memory_space<vmem>>, vector<16x32xf32>
    %c0_1 = arith.constant 0 : index
    %c0_2 = arith.constant 0 : index
    %1 = vector.load %arg2[%c0_1, %c0_2] : memref<32x128xf32, #tpu.memory_space<vmem>>, vector<32x128xf32>
    %cst = arith.constant dense<0.000000e+00> : vector<16x128xf32>
    %2 = tpu.matmul %0, %1, %cst {dimension_numbers = #tpu.dot_dimension_numbers<[1], [0], [0], [1], [0, 0, 1, 1], [], []>} : vector<16x32xf32>, vector<32x128xf32>, vector<16x128xf32> -> vector<16x128xf32>
    %cst_3 = arith.constant 0.797884583 : f32
    %3 = vector.broadcast %cst_3 : f32 to vector<16x128xf32>
    %4 = arith.mulf %3, %2 : vector<16x128xf32>
    %5 = arith.mulf %2, %2 : vector<16x128xf32>
    %cst_4 = arith.constant 4.471500e-02 : f32
    %6 = vector.broadcast %cst_4 : f32 to vector<16x128xf32>
    %7 = arith.mulf %6, %5 : vector<16x128xf32>
    %cst_5 = arith.constant 1.000000e+00 : f32
    %8 = vector.broadcast %cst_5 : f32 to vector<16x128xf32>
    %9 = arith.addf %8, %7 : vector<16x128xf32>
    %10 = arith.mulf %4, %9 : vector<16x128xf32>
    %cst_6 = arith.constant 5.000000e-01 : f32
    %11 = vector.broadcast %cst_6 : f32 to vector<16x128xf32>
    %12 = arith.mulf %11, %2 : vector<16x128xf32>
    %13 = math.tanh %10 : vector<16x128xf32>
    %cst_7 = arith.constant 1.000000e+00 : f32
    %14 = vector.broadcast %cst_7 : f32 to vector<16x128xf32>
    %15 = arith.addf %14, %13 : vector<16x128xf32>
    %16 = arith.mulf %12, %15 : vector<16x128xf32>
    %c0_8 = arith.constant 0 : index
    %c0_9 = arith.constant 0 : index
    %17 = vector.load %arg3[%c0_8, %c0_9] : memref<128x128xf32, #tpu.memory_space<vmem>>, vector<128x128xf32>
    %cst_10 = arith.constant dense<0.000000e+00> : vector<16x128xf32>
    %18 = tpu.matmul %16, %17, %cst_10 {dimension_numbers = #tpu.dot_dimension_numbers<[1], [0], [0], [1], [0, 0, 1, 1], [], []>} : vector<16x128xf32>, vector<128x128xf32>, vector<16x128xf32> -> vector<16x128xf32>
    %c0_11 = arith.constant 0 : index
    %c0_12 = arith.constant 0 : index
    %19 = vector.load %arg4[%c0_11, %c0_12] : memref<16x128xf32, #tpu.memory_space<vmem>>, vector<16x128xf32>
    tpu.vector_store %arg4[%c0_11, %c0_12], %18 {strides = array<i32>} : memref<16x128xf32, #tpu.memory_space<vmem>>, vector<16x128xf32>,
    return
  }
  func.func @transform_0(%arg0: i32) -> (i32, i32) {
    %c0_i32 = arith.constant 0 : i32
    %c0_i32_0 = arith.constant 0 : i32
    return %arg0, %c0_i32 : i32, i32
  }
  func.func @transform_1(%arg0: i32) -> (i32, i32) {
    %c0_i32 = arith.constant 0 : i32
    %c0_i32_0 = arith.constant 0 : i32
    %c0_i32_1 = arith.constant 0 : i32
    return %c0_i32, %c0_i32_0 : i32, i32
  }
  func.func @transform_2(%arg0: i32) -> (i32, i32) {
    %c0_i32 = arith.constant 0 : i32
    %c0_i32_0 = arith.constant 0 : i32
    %c0_i32_1 = arith.constant 0 : i32
    return %c0_i32, %c0_i32_0 : i32, i32
  }
  func.func @transform_3(%arg0: i32) -> (i32, i32) {
    %c0_i32 = arith.constant 0 : i32
    %c0_i32_0 = arith.constant 0 : i32
    return %arg0, %c0_i32 : i32, i32
  }
}

</mosaic_0001>

<llo_original>
// kernel: tpu_custom_call.1
$region0: #{tpu_custom_call.1}
  #allocation0 [shape = 'u32[]', space=smem, size = 0x4, offset = 0x4, fixed_abs, tag = 'smem constant byte address 0x4 - core index']
  #allocation1 [shape = 'u32[144,128]{1,0:T(1,128)}', space=vmem, size = 0x12000, scoped, tag = 'internal scratch']
  %s0 = inlined_call_operand.hbm [shape: f32[16,32], index: 0, kind: input, shape index: {}]
  %s1 = inlined_call_operand.hbm [shape: f32[32,128], index: 1, kind: input, shape index: {}]
  %s2 = inlined_call_operand.hbm [shape: f32[128,128], index: 2, kind: input, shape index: {}]
  %s3 = inlined_call_operand.hbm [shape: f32[16,128], index: 3, kind: output, shape index: {}]
  %s4 = sld [smem:[#allocation0]]
  $region34: #{tpu_custom_call.1} parent=0
    _
  %s6 = ssub.s32 1, %s4
  %s7 = scalar_select 0, %s6, %s4
  $region1: #{tpu_custom_call.1} parent=0
    #allocation2 [shape = 'u8[8192]{0}', space=vmem, size = 0x2000, scoped, tag = 'input window, operand 0, single buffered']
    #allocation3 [shape = 's32[1]{0}', space=sflag, size = 0x4, scoped, tag = 'scoped memory for tpu_custom_call.1']
    #allocation4 [shape = 's32[1]{0}', space=sflag, size = 0x4, scoped, tag = 'scoped memory for tpu_custom_call.1']
    #allocation5 [shape = 'u8[16384]{0}', space=vmem, size = 0x4000, scoped, tag = 'input window, operand 1, single buffered']
    #allocation6 [shape = 's32[1]{0}', space=sflag, size = 0x4, scoped, tag = 'scoped memory for tpu_custom_call.1']
    #allocation7 [shape = 'u8[65536]{0}', space=vmem, size = 0x10000, scoped, tag = 'input window, operand 2, single buffered']
    #allocation8 [shape = 'u8[8192]{0}', space=vmem, size = 0x2000, scoped, tag = 'output window, operand 0, single buffered']
    %8 = vsyncpa [#allocation3], 0
    %9 = vsyncpa [#allocation6], 0
    %10 = vsyncpa [#allocation4], 0
    // Predicated region
    $region2: #{tpu_custom_call.1} parent=1 // pred_check
      _
    $region3: #{tpu_custom_call.1} parent=1 // pred_check_branch
      %12 = sbr.rel (0) target = $region5
    $region4: #{tpu_custom_call.1} parent=1 // pred_region
      %s14 = ssub.s32 256, 256
      %15 = vsyncadd [#allocation3], %s14
      %s16 = sshll.u32 [#allocation2], 4
      %s17 = int_to_ptr.vmem [resolvable:$true] %s16
      %22 = dma.hbm_to_vmem [thread:$0]  %s0, 256, %s17, [#allocation3], 128, 128, 8
    $region5: #{tpu_custom_call.1} parent=1 // pred_fallthru
      _
    // Predicated region
    $region6: #{tpu_custom_call.1} parent=1 // pred_check
      _
    $region7: #{tpu_custom_call.1} parent=1 // pred_check_branch
      %24 = sbr.rel (0) target = $region9
    $region8: #{tpu_custom_call.1} parent=1 // pred_region
      %s26 = ssub.s32 512, 512
      %27 = vsyncadd [#allocation6], %s26
      %s28 = sshll.u32 [#allocation5], 4
      %s29 = int_to_ptr.vmem [resolvable:$true] %s28
      %34 = dma.hbm_to_vmem [thread:$0]  %s1, 512, %s29, [#allocation6], 128, 128, 8
    $region9: #{tpu_custom_call.1} parent=1 // pred_fallthru
      _
    // Predicated region
    $region10: #{tpu_custom_call.1} parent=1 // pred_check
      _
    $region11: #{tpu_custom_call.1} parent=1 // pred_check_branch
      %36 = sbr.rel (0) target = $region13
    $region12: #{tpu_custom_call.1} parent=1 // pred_region
      %s38 = ssub.s32 2048, 2048
      %39 = vsyncadd [#allocation6], %s38
      %s40 = sshll.u32 [#allocation7], 4
      %s41 = int_to_ptr.vmem [resolvable:$true] %s40
      %46 = dma.hbm_to_vmem [thread:$0]  %s2, 2048, %s41, [#allocation6], 128, 128, 8
    $region13: #{tpu_custom_call.1} parent=1 // pred_fallthru
      _
    // Predicated region
    $region14: #{tpu_custom_call.1} parent=1 // pred_check
      _
    $region15: #{tpu_custom_call.1} parent=1 // pred_check_branch
      %48 = sbr.rel (0) target = $region17
    $region16: #{tpu_custom_call.1} parent=1 // pred_region
      %49 = dma.done [#allocation3], 256
    $region17: #{tpu_custom_call.1} parent=1 // pred_fallthru
      _
    // Predicated region
    $region18: #{tpu_custom_call.1} parent=1 // pred_check
      _
    $region19: #{tpu_custom_call.1} parent=1 // pred_check_branch
      %51 = sbr.rel (0) target = $region21
    $region20: #{tpu_custom_call.1} parent=1 // pred_region
      %52 = dma.done [#allocation6], 512
    $region21: #{tpu_custom_call.1} parent=1 // pred_fallthru
      _
    // Predicated region
    $region22: #{tpu_custom_call.1} parent=1 // pred_check
      _
    $region23: #{tpu_custom_call.1} parent=1 // pred_check_branch
      %54 = sbr.rel (0) target = $region25
    $region24: #{tpu_custom_call.1} parent=1 // pred_region
      %55 = dma.done [#allocation6], 2048
    $region25: #{tpu_custom_call.1} parent=1 // pred_fallthru
      _
    %v56 = vld [vmem:[#allocation2] sm:$0xff]
    %v57 = vld [vmem:[#allocation2 + $0x8] sm:$0xff]
    %v58 = vld [vmem:[#allocation5] sm:$0xff]
    %v59 = vld [vmem:[#allocation5 + $0x8] sm:$0xff]
    %v60 = vld [vmem:[#allocation5 + $0x10] sm:$0xff]
    %v61 = vld [vmem:[#allocation5 + $0x18] sm:$0xff]
    %vm62 = vcmask 261120
    %v64 = vsel %vm62, %v56, 0
    %v67 = vsel %vm62, %v57, 0
    %69 = vmatprep.subr.mxu0 0.0
    %70 = vmatpush1.msra.mxu0 %v58
    %71 = vmatprep.subr.mxu0 0.0
    %72 = vmatpush1.msra.mxu0 %v59
    %73 = vmatprep.subr.mxu0 0.0
    %74 = vmatpush1.msra.mxu0 %v60
    %75 = vmatprep.subr.mxu0 0.0
    %76 = vmatpush1.msra.mxu0 %v61
    %77 = vmatprep.subr.mxu0 0.0
    %78 = vmatpush1.msra.mxu0 0.0
    %79 = vmatprep.subr.mxu0 0.0
    %80 = vmatpush1.msra.mxu0 0.0
    %81 = vmatprep.subr.mxu0 0.0
    %82 = vmatpush1.msra.mxu0 0.0
    %83 = vmatprep.subr.mxu0 0.0
    %84 = vmatpush1.msra.mxu0 0.0
    %85 = vmatprep.subr.mxu0 0.0
    %86 = vmatpush1.msra.mxu0 0.0
    %87 = vmatprep.subr.mxu0 0.0
    %88 = vmatpush1.msra.mxu0 0.0
    %89 = vmatprep.subr.mxu0 0.0
    %90 = vmatpush1.msra.mxu0 0.0
    %91 = vmatprep.subr.mxu0 0.0
    %92 = vmatpush1.msra.mxu0 0.0
    %93 = vmatprep.subr.mxu0 0.0
    %94 = vmatpush1.msra.mxu0 0.0
    %95 = vmatprep.subr.mxu0 0.0
    %96 = vmatpush1.msra.mxu0 0.0
    %97 = vmatprep.subr.mxu0 0.0
    %98 = vmatpush1.msra.mxu0 0.0
    %99 = vmatprep.subr.mxu0 0.0
    %100 = vmatpush1.msra.mxu0 0.0
    %101 = vmatprep.subr.mxu0 0.0
    %102 = vmatpush1.msra.mxu0 0.0
    %103 = vmatprep.subr.mxu0 0.0
    %104 = vmatpush1.msra.mxu0 0.0
    %105 = vmatprep.subr.mxu0 0.0
    %106 = vmatpush1.msra.mxu0 0.0
    %107 = vmatprep.subr.mxu0 0.0
    %108 = vmatpush1.msra.mxu0 0.0
    %109 = vmatprep.subr.mxu0 0.0
    %110 = vmatpush1.msra.mxu0 0.0
    %111 = vmatprep.subr.mxu0 0.0
    %112 = vmatpush1.msra.mxu0 0.0
    %113 = vmatprep.subr.mxu0 0.0
    %114 = vmatpush1.msra.mxu0 0.0
    %115 = vmatprep.subr.mxu0 0.0
    %116 = vmatpush1.msra.mxu0 0.0
    %117 = vmatprep.subr.mxu0 0.0
    %118 = vmatpush1.msra.mxu0 0.0
    %119 = vmatprep.subr.mxu0 0.0
    %120 = vmatpush1.msra.mxu0 0.0
    %121 = vmatprep.subr.mxu0 0.0
    %122 = vmatpush1.msra.mxu0 0.0
    %123 = vmatprep.subr.mxu0 0.0
    %124 = vmatpush1.msra.mxu0 0.0
    %125 = vmatprep.subr.mxu0 0.0
    %126 = vmatpush1.msra.mxu0 0.0
    %127 = vmatprep.subr.mxu0 0.0
    %128 = vmatpush1.msra.mxu0 0.0
    %129 = vmatprep.subr.mxu0 0.0
    %130 = vmatpush1.msra.mxu0 0.0
    %131 = vmatprep.subr.mxu0 0.0
    %132 = vmatpush1.msra.mxu0 0.0
    %133 = vmatprep.mubr.f32.mxu0 0.0
    %134 = vmatmul.mubr.f32.gmra.mrb[0].mxu0 %v64
    %v135 = vpop.f32.mrb[0].mxu0
    %v136 = vadd.f32 0.0, %v135
    %v137 = vpop.f32.mrb[0].mxu0
    %138 = vmatprep.mubr.f32.mxu0 0.0
    %139 = vmatmul.mubr.f32.gmra.mrb[0].mxu0 %v67
    %v140 = vpop.f32.mrb[0].mxu0
    %v141 = vadd.f32 0.0, %v140
    %v142 = vpop.f32.mrb[0].mxu0
    %143 = vdwg.mxu0
    %v144 = vmul.f32 %v136, 0.7978846
    %v145 = vmul.f32 %v141, 0.7978846
    %v146 = vmul.f32 %v136, %v136
    %v147 = vmul.f32 %v141, %v141
    %v148 = vmul.f32 %v146, 0.044715
    %v149 = vmul.f32 %v147, 0.044715
    %v150 = vadd.f32 %v148, 1.0
    %v151 = vadd.f32 %v149, 1.0
    %v152 = vmul.f32 %v144, %v150
    %v153 = vmul.f32 %v145, %v151
    %v154 = vmul.f32 %v136, 0.5
    %v155 = vmul.f32 %v141, 0.5
    %v156 = vtanh.pop %v152
    %v157 = vtanh.pop %v153
    %v158 = vadd.f32 %v156, 1.0
    %v159 = vadd.f32 %v157, 1.0
    %v160 = vmul.f32 %v154, %v158
    %v161 = vmul.f32 %v155, %v159
    %v162 = vld [vmem:[#allocation7] sm:$0xff]
    %v163 = vld [vmem:[#allocation7 + $0x8] sm:$0xff]
    %v164 = vld [vmem:[#allocation7 + $0x10] sm:$0xff]
    %v165 = vld [vmem:[#allocation7 + $0x18] sm:$0xff]
    %v166 = vld [vmem:[#allocation7 + $0x20] sm:$0xff]
    %v167 = vld [vmem:[#allocation7 + $0x28] sm:$0xff]
    %v168 = vld [vmem:[#allocation7 + $0x30] sm:$0xff]
    %v169 = vld [vmem:[#allocation7 + $0x38] sm:$0xff]
    %v170 = vld [vmem:[#allocation7 + $0x40] sm:$0xff]
    %v171 = vld [vmem:[#allocation7 + $0x48] sm:$0xff]
    %v172 = vld [vmem:[#allocation7 + $0x50] sm:$0xff]
    %v173 = vld [vmem:[#allocation7 + $0x58] sm:$0xff]
    %v174 = vld [vmem:[#allocation7 + $0x60] sm:$0xff]
    %v175 = vld [vmem:[#allocation7 + $0x68] sm:$0xff]
    %v176 = vld [vmem:[#allocation7 + $0x70] sm:$0xff]
    %v177 = vld [vmem:[#allocation7 + $0x78] sm:$0xff]
    %178 = vmatprep.subr.mxu0 0.0
    %179 = vmatpush1.msra.mxu0 %v162
    %180 = vmatprep.subr.mxu0 0.0
    %181 = vmatpush1.msra.mxu0 %v163
    %182 = vmatprep.subr.mxu0 0.0
    %183 = vmatpush1.msra.mxu0 %v164
    %184 = vmatprep.subr.mxu0 0.0
    %185 = vmatpush1.msra.mxu0 %v165
    %186 = vmatprep.subr.mxu0 0.0
    %187 = vmatpush1.msra.mxu0 %v166
    %188 = vmatprep.subr.mxu0 0.0
    %189 = vmatpush1.msra.mxu0 %v167
    %190 = vmatprep.subr.mxu0 0.0
    %191 = vmatpush1.msra.mxu0 %v168
    %192 = vmatprep.subr.mxu0 0.0
    %193 = vmatpush1.msra.mxu0 %v169
    %194 = vmatprep.subr.mxu0 0.0
    %195 = vmatpush1.msra.mxu0 %v170
    %196 = vmatprep.subr.mxu0 0.0
    %197 = vmatpush1.msra.mxu0 %v171
    %198 = vmatprep.subr.mxu0 0.0
    %199 = vmatpush1.msra.mxu0 %v172
    %200 = vmatprep.subr.mxu0 0.0
    %201 = vmatpush1.msra.mxu0 %v173
    %202 = vmatprep.subr.mxu0 0.0
    %203 = vmatpush1.msra.mxu0 %v174
    %204 = vmatprep.subr.mxu0 0.0
    %205 = vmatpush1.msra.mxu0 %v175
    %206 = vmatprep.subr.mxu0 0.0
    %207 = vmatpush1.msra.mxu0 %v176
    %208 = vmatprep.subr.mxu0 0.0
    %209 = vmatpush1.msra.mxu0 %v177
    %210 = vmatprep.subr.mxu0 0.0
    %211 = vmatpush1.msra.mxu0 0.0
    %212 = vmatprep.subr.mxu0 0.0
    %213 = vmatpush1.msra.mxu0 0.0
    %214 = vmatprep.subr.mxu0 0.0
    %215 = vmatpush1.msra.mxu0 0.0
    %216 = vmatprep.subr.mxu0 0.0
    %217 = vmatpush1.msra.mxu0 0.0
    %218 = vmatprep.subr.mxu0 0.0
    %219 = vmatpush1.msra.mxu0 0.0
    %220 = vmatprep.subr.mxu0 0.0
    %221 = vmatpush1.msra.mxu0 0.0
    %222 = vmatprep.subr.mxu0 0.0
    %223 = vmatpush1.msra.mxu0 0.0
    %224 = vmatprep.subr.mxu0 0.0
    %225 = vmatpush1.msra.mxu0 0.0
    %226 = vmatprep.subr.mxu0 0.0
    %227 = vmatpush1.msra.mxu0 0.0
    %228 = vmatprep.subr.mxu0 0.0
    %229 = vmatpush1.msra.mxu0 0.0
    %230 = vmatprep.subr.mxu0 0.0
    %231 = vmatpush1.msra.mxu0 0.0
    %232 = vmatprep.subr.mxu0 0.0
    %233 = vmatpush1.msra.mxu0 0.0
    %234 = vmatprep.subr.mxu0 0.0
    %235 = vmatpush1.msra.mxu0 0.0
    %236 = vmatprep.subr.mxu0 0.0
    %237 = vmatpush1.msra.mxu0 0.0
    %238 = vmatprep.subr.mxu0 0.0
    %239 = vmatpush1.msra.mxu0 0.0
    %240 = vmatprep.subr.mxu0 0.0
    %241 = vmatpush1.msra.mxu0 0.0
    %242 = vmatprep.mubr.f32.mxu0 0.0
    %243 = vmatmul.mubr.f32.gmra.mrb[0].mxu0 %v160
    %v244 = vpop.f32.mrb[0].mxu0
    %v245 = vadd.f32 0.0, %v244
    %v246 = vpop.f32.mrb[0].mxu0
    %247 = vmatprep.mubr.f32.mxu0 0.0
    %248 = vmatmul.mubr.f32.gmra.mrb[0].mxu0 %v161
    %v249 = vpop.f32.mrb[0].mxu0
    %v250 = vadd.f32 0.0, %v249
    %v251 = vpop.f32.mrb[0].mxu0
    %252 = vdwg.mxu0
    %253 = vst [vmem:[#allocation8] sm:$0xff] %v245
    %254 = vst [vmem:[#allocation8 + $0x8] sm:$0xff] %v250
    // Predicated region
    $region26: #{tpu_custom_call.1} parent=1 // pred_check
      _
    $region27: #{tpu_custom_call.1} parent=1 // pred_check_branch
      %256 = sbr.rel (0) target = $region29
    $region28: #{tpu_custom_call.1} parent=1 // pred_region
      %s258 = ssub.s32 256, 256
      %259 = vsyncadd [#allocation4], %s258
      %s260 = sshll.u32 [#allocation8], 4
      %s261 = int_to_ptr.vmem [resolvable:$true] %s260
      %266 = dma.vmem_to_hbm [thread:$0]  %s261, 256, %s3, [#allocation4], 128, 128, 8
    $region29: #{tpu_custom_call.1} parent=1 // pred_fallthru
      _
    // Predicated region
    $region30: #{tpu_custom_call.1} parent=1 // pred_check
      _
    $region31: #{tpu_custom_call.1} parent=1 // pred_check_branch
      %268 = sbr.rel (0) target = $region33
    $region32: #{tpu_custom_call.1} parent=1 // pred_region
      %269 = dma.done [#allocation4], 256
    $region33: #{tpu_custom_call.1} parent=1 // pred_fallthru
      _
    %270 = vsyncpa [#allocation3], 1
    %271 = vsyncpa [#allocation6], 1
    %272 = vsyncpa [#allocation4], 1

</llo_original>
